<compile_context>
chip_gen: v6e
topology: v6e:2x2x1
jax: 0.10.0
libtpu: 0.0.40
codegen_flags: <defaults>
</compile_context>

<pallas_src>
import jax
import jax.numpy as jnp
from jax.experimental import pallas as pl
from jax.experimental.pallas import tpu as pltpu

_LANES = 128
_SUBLANES = 8
_L_USED = 13


def _make_nomad_loss_kernel(tile_rows: int, valid_elems: int,
                            num_tiles: int, need_mask: bool):
    """Per-tile (8,128) per-lane partial sum of |test - ref|."""
    tile_elems = tile_rows * _LANES
    n_vregs = tile_rows // _SUBLANES

    def _row_reduce(a):
        # (tile_rows, 128) -> (n_vregs, 8, 128): pure sublane regrouping of the
        # same vregs; the axis-0 sum is elementwise vreg adds on the VPU.
        return jnp.sum(a.reshape(n_vregs, _SUBLANES, _LANES), axis=0)

    def kernel(ref_ref, test_ref, out_ref):
        # Upcast before subtract: exact parity with the f32 reference for
        # bf16 inputs; a no-op for f32.  Fully hidden under the HBM stream.
        a = jnp.abs(test_ref[...].astype(jnp.float32)
                    - ref_ref[...].astype(jnp.float32))

        if need_mask:
            i = pl.program_id(0)
            is_last = i == num_tiles - 1

            @pl.when(jnp.logical_not(is_last))
            def _():
                out_ref[...] = _row_reduce(a)

            @pl.when(is_last)
            def _():
                # Element-granularity mask: only elements below the 13*N
                # boundary (relative to this tile's start) contribute.  Rows
                # past the boundary hold layer>=13 data or clipped-DMA
                # leftovers; both are zeroed here.
                remaining = valid_elems - i * tile_elems   # scalar in (0, tile_elems]
                row = jax.lax.broadcasted_iota(jnp.int32, (tile_rows, _LANES), 0)
                lane = jax.lax.broadcasted_iota(jnp.int32, (tile_rows, _LANES), 1)
                elem = row * _LANES + lane
                out_ref[...] = _row_reduce(jnp.where(elem < remaining, a, 0.0))
        else:
            out_ref[...] = _row_reduce(a)

    return kernel


def nomad_loss(nomad_ref: jax.Array, nomad_test: jax.Array,
               *, only_embedding: bool = False,
               target_tile_bytes: int = 4 * 1024 * 1024) -> jax.Array:
    """nomad_ref / nomad_test: [L, ...] stacked layer features (L >= 13).

    Returns a scalar: sum over the first 13 layers of mean(|test - ref|).
    """
    if only_embedding:
        # TODO(synk): only_embedding=True (L1 on layer index 13 only) is not
        # implemented; guard so callers cannot silently hit this path.
        raise NotImplementedError("NomadLoss only_embedding=True not supported")

    assert nomad_ref.shape == nomad_test.shape
    assert nomad_ref.dtype == nomad_test.dtype
    L = nomad_ref.shape[0]
    assert L >= _L_USED

    per_layer = 1
    for s in nomad_ref.shape[1:]:
        per_layer *= int(s)
    valid_elems = _L_USED * per_layer          # elements that contribute
    total_all = L * per_layer                  # elements in the full array
    inv_n = 1.0 / float(per_layer)

    dtype = nomad_ref.dtype
    itemsize = jnp.dtype(dtype).itemsize

    # Lane-dense slab over the FULL array: no layer slice, no pad when the
    # total element count is lane aligned -> no extra HBM pass.
    if total_all % _LANES == 0:
        slab_rows = total_all // _LANES

        def to_slab(x):
            return x.reshape(slab_rows, _LANES)
    else:
        # Fallback only for odd total sizes: pad < 128 elements (one copy).
        slab_rows = pl.cdiv(total_all, _LANES)
        pad = slab_rows * _LANES - total_all

        def to_slab(x):
            return jnp.pad(x.reshape(-1), (0, pad)).reshape(slab_rows, _LANES)

    # Rows needed to cover the first 13 layers.
    rows_valid = pl.cdiv(valid_elems, _LANES)

    # Byte-based, dtype-aware tile sizing (keeps DMA-per-step vs step-overhead
    # ratio constant across dtypes; 16-row multiples keep bf16 packing clean).
    align = {1: 32, 2: 16}.get(itemsize, _SUBLANES)
    tile_rows = max(align,
                    (target_tile_bytes // (_LANES * itemsize)) // align * align)
    rows_valid_aligned = pl.cdiv(rows_valid, align) * align
    tile_rows = min(tile_rows, rows_valid_aligned)

    # Keep >= ~4 grid steps so the "parallel" axis can shard across v7x's
    # 2 TensorCores (irrelevant on single-TC v5e/v6e).
    min_tiles = 4
    if pl.cdiv(rows_valid, tile_rows) < min_tiles:
        tile_rows = min(tile_rows,
                        max(align,
                            pl.cdiv(pl.cdiv(rows_valid, min_tiles), align) * align))

    num_tiles = pl.cdiv(rows_valid, tile_rows)
    need_mask = (num_tiles * tile_rows * _LANES) != valid_elems

    kernel = _make_nomad_loss_kernel(tile_rows, valid_elems, num_tiles, need_mask)

    r2d = to_slab(nomad_ref)
    t2d = to_slab(nomad_test)

    tile_bytes = tile_rows * _LANES * itemsize
    # 2 inputs x 2 buffers x tile + outputs, plus headroom; capped well below
    # v7x's 64 MiB-per-TC physical VMEM.
    vmem_limit = int(min(4 * tile_bytes + (8 << 20), 48 << 20))

    cost = pl.CostEstimate(
        flops=2 * valid_elems,                                  # sub + abs
        transcendentals=0,
        bytes_accessed=2 * valid_elems * itemsize
        + num_tiles * _SUBLANES * _LANES * 4,
    )

    partials = pl.pallas_call(
        kernel,
        out_shape=jax.ShapeDtypeStruct((num_tiles * _SUBLANES, _LANES),
                                       jnp.float32),
        grid_spec=pltpu.PrefetchScalarGridSpec(
            num_scalar_prefetch=0,
            grid=(num_tiles,),
            in_specs=[
                pl.BlockSpec((tile_rows, _LANES), lambda i: (i, 0)),
                pl.BlockSpec((tile_rows, _LANES), lambda i: (i, 0)),
            ],
            # Independent per-tile (8,128) partials -> grid axis is parallel.
            out_specs=pl.BlockSpec((_SUBLANES, _LANES), lambda i: (i, 0)),
        ),
        compiler_params=pltpu.CompilerParams(
            dimension_semantics=("parallel",),
            vmem_limit_bytes=vmem_limit,
        ),
        cost_estimate=cost,
    )(r2d, t2d)

    # Tiny cross-lane / cross-tile finish + 1/N scale in plain JAX.
    return jnp.sum(partials, dtype=jnp.float32) * jnp.float32(inv_n)


def nomad_loss_ref(nomad_ref: jax.Array, nomad_test: jax.Array) -> jax.Array:
    """Pure-JAX reference mirroring the PyTorch loop."""
    acc = jnp.float32(0.0)
    for i in range(_L_USED):
        acc = acc + jnp.mean(
            jnp.abs(nomad_test[i].astype(jnp.float32)
                    - nomad_ref[i].astype(jnp.float32)))
    return acc


if __name__ == "__main__":
    # Small shapes implied by the forward: >= 14 stacked layer features of
    # [batch, seq, hidden] (index 13 exists for the only_embedding path).
    L, B, T, D = 14, 2, 8, 32
    key = jax.random.PRNGKey(0)
    k1, k2 = jax.random.split(key)
    nomad_ref_feats = jax.random.normal(k1, (L, B, T, D), dtype=jnp.float32)
    nomad_test_feats = jax.random.normal(k2, (L, B, T, D), dtype=jnp.float32)

    out = nomad_loss(nomad_ref_feats, nomad_test_feats)
    out = jax.block_until_ready(out)

    expected = nomad_loss_ref(nomad_ref_feats, nomad_test_feats)
    assert jnp.allclose(out, expected, rtol=1e-5, atol=1e-5), (out, expected)

    print("KERNEL_OK")
</pallas_src>

<mosaic_0001>
module attributes {stable_mosaic.version = 11 : i64} {
  func.func @kernel(%arg0: i32, %arg1: memref<16x128xf32, #tpu.memory_space<vmem>>, %arg2: memref<16x128xf32, #tpu.memory_space<vmem>>, %arg3: memref<8x128xf32, #tpu.memory_space<vmem>>) attributes {dimension_semantics = [#tpu.dimension_semantics<parallel>], iteration_bounds = array<i64: 4>, scalar_prefetch = 0 : i64, scratch_operands = 0 : i64, tpu.core_type = #tpu.core_type<tc>, window_params = [{transform_indices = @transform_0, window_bounds = array<i64: 16, 128>}, {transform_indices = @transform_1, window_bounds = array<i64: 16, 128>}, {transform_indices = @transform_2, window_bounds = array<i64: 8, 128>}]} {
    %c0 = arith.constant 0 : index
    %c0_0 = arith.constant 0 : index
    %0 = vector.load %arg2[%c0, %c0_0] : memref<16x128xf32, #tpu.memory_space<vmem>>, vector<16x128xf32>
    %c0_1 = arith.constant 0 : index
    %c0_2 = arith.constant 0 : index
    %1 = vector.load %arg1[%c0_1, %c0_2] : memref<16x128xf32, #tpu.memory_space<vmem>>, vector<16x128xf32>
    %2 = arith.subf %0, %1 : vector<16x128xf32>
    %3 = math.absf %2 : vector<16x128xf32>
    %c3_i32 = arith.constant 3 : i32
    %4 = arith.cmpi eq, %arg0, %c3_i32 : i32
    %true = arith.constant true
    %5 = arith.xori %4, %true : i1
    %6 = arith.extui %5 : i1 to i32
    %c0_i32 = arith.constant 0 : i32
    %7 = arith.cmpi ne, %6, %c0_i32 : i32
    scf.if %7 {
      %10 = vector.shape_cast %3 : vector<16x128xf32> to vector<2x8x128xf32>
      %cst = arith.constant dense<0.000000e+00> : vector<8x128xf32>
      %11 = vector.multi_reduction <add>, %10, %cst [0] : vector<2x8x128xf32> to vector<8x128xf32>
      %c0_4 = arith.constant 0 : index
      %c0_5 = arith.constant 0 : index
      %12 = vector.load %arg3[%c0_4, %c0_5] : memref<8x128xf32, #tpu.memory_space<vmem>>, vector<8x128xf32>
      tpu.vector_store %arg3[%c0_4, %c0_5], %11 {strides = array<i32>} : memref<8x128xf32, #tpu.memory_space<vmem>>, vector<8x128xf32>,
    } else {
    }
    %8 = arith.extui %4 : i1 to i32
    %c0_i32_3 = arith.constant 0 : i32
    %9 = arith.cmpi ne, %8, %c0_i32_3 : i32
    scf.if %9 {
      %c2048_i32 = arith.constant 2048 : i32
      %10 = arith.muli %arg0, %c2048_i32 : i32
      %c6656_i32 = arith.constant 6656 : i32
      %11 = arith.subi %c6656_i32, %10 : i32
      %12 = tpu.iota {dimensions = array<i32: 0>} : vector<16x128xi32>
      %13 = tpu.iota {dimensions = array<i32: 1>} : vector<16x128xi32>
      %c128_i32 = arith.constant 128 : i32
      %14 = vector.broadcast %c128_i32 : i32 to vector<16x128xi32>
      %15 = arith.muli %12, %14 : vector<16x128xi32>
      %16 = arith.addi %15, %13 : vector<16x128xi32>
      %17 = vector.broadcast %11 : i32 to vector<16x128xi32>
      %18 = arith.cmpi slt, %16, %17 : vector<16x128xi32>
      %cst = arith.constant 0.000000e+00 : f32
      %19 = vector.broadcast %cst : f32 to vector<16x128xf32>
      %20 = arith.select %18, %3, %19 : vector<16x128xi1>, vector<16x128xf32>
      %21 = vector.shape_cast %20 : vector<16x128xf32> to vector<2x8x128xf32>
      %cst_4 = arith.constant dense<0.000000e+00> : vector<8x128xf32>
      %22 = vector.multi_reduction <add>, %21, %cst_4 [0] : vector<2x8x128xf32> to vector<8x128xf32>
      %c0_5 = arith.constant 0 : index
      %c0_6 = arith.constant 0 : index
      %23 = vector.load %arg3[%c0_5, %c0_6] : memref<8x128xf32, #tpu.memory_space<vmem>>, vector<8x128xf32>
      tpu.vector_store %arg3[%c0_5, %c0_6], %22 {strides = array<i32>} : memref<8x128xf32, #tpu.memory_space<vmem>>, vector<8x128xf32>,
    } else {
    }
    return
  }
  func.func @transform_0(%arg0: i32) -> (i32, i32) {
    %c0_i32 = arith.constant 0 : i32
    %c0_i32_0 = arith.constant 0 : i32
    return %arg0, %c0_i32 : i32, i32
  }
  func.func @transform_1(%arg0: i32) -> (i32, i32) {
    %c0_i32 = arith.constant 0 : i32
    %c0_i32_0 = arith.constant 0 : i32
    return %arg0, %c0_i32 : i32, i32
  }
  func.func @transform_2(%arg0: i32) -> (i32, i32) {
    %c0_i32 = arith.constant 0 : i32
    %c0_i32_0 = arith.constant 0 : i32
    return %arg0, %c0_i32 : i32, i32
  }
}

</mosaic_0001>

<llo_original>
// kernel: tpu_custom_call.1
$region0: #{tpu_custom_call.1}
  #allocation0 [shape = 'u32[]', space=smem, size = 0x4, offset = 0x4, fixed_abs, tag = 'smem constant byte address 0x4 - core index']
  #allocation1 [shape = 'u32[144,128]{1,0:T(1,128)}', space=vmem, size = 0x12000, scoped, tag = 'internal scratch']
  %s0 = inlined_call_operand.hbm [shape: f32[56,128], index: 0, kind: input, shape index: {}]
  %s1 = inlined_call_operand.hbm [shape: f32[56,128], index: 1, kind: input, shape index: {}]
  %s2 = inlined_call_operand.hbm [shape: f32[32,128], index: 2, kind: output, shape index: {}]
  %s3 = sld [smem:[#allocation0]]
  $region57: #{tpu_custom_call.1} parent=0
    _
  %s5 = ssub.s32 1, %s3
  %s6 = scalar_select 0, %s5, %s3
  $region1: #{tpu_custom_call.1} parent=0
    #allocation2 [shape = 'u8[16384]{0}', space=vmem, size = 0x4000, scoped, tag = 'input window, operand 0']
    #allocation3 [shape = 's32[2]{0}', space=sflag, size = 0x8, scoped, tag = 'scoped memory for tpu_custom_call.1']
    #allocation4 [shape = 's32[2]{0}', space=sflag, size = 0x8, scoped, tag = 'scoped memory for tpu_custom_call.1']
    #allocation5 [shape = 'u8[16384]{0}', space=vmem, size = 0x4000, scoped, tag = 'input window, operand 1']
    #allocation6 [shape = 's32[2]{0}', space=sflag, size = 0x8, scoped, tag = 'scoped memory for tpu_custom_call.1']
    #allocation7 [shape = 'u8[8192]{0}', space=vmem, size = 0x2000, scoped, tag = 'output window, operand 0']
    %7 = vsyncpa [#allocation3], 0
    %s8 = scalar_lea.sflag [#allocation3], 1
    %9 = vsyncpa %s8, 0
    %10 = vsyncpa [#allocation6], 0
    %s11 = scalar_lea.sflag [#allocation6], 1
    %12 = vsyncpa %s11, 0
    %13 = vsyncpa [#allocation4], 0
    %s14 = scalar_lea.sflag [#allocation4], 1
    %15 = vsyncpa %s14, 0
    loop: start=0, step=1, limit=6
    $region2: #{tpu_custom_call.1} parent=1 // loop_pre_header
      _
    $region3: #{tpu_custom_call.1} parent=1 // loop_header
      %s17 = sphi 0, %s21
      %p18 = scmp.ge.s32.totalorder %s17, 6
      %s27 = sphi 0, %s29
      %s30 = sphi 0, %s27
      %s31 = sphi 0, %s30
      %s47 = sphi 0, %s31
      %s53 = sphi 0, %s55
      %s56 = sphi 0, %s53
      %s57 = sphi 0, %s56
      %s73 = sphi 0, %s57
      %s79 = sphi 0, %s81
      %s82 = sphi 0, %s79
      %s83 = sphi 0, %s82
      %s99 = sphi 0, %s83
    $region4: #{tpu_custom_call.1} parent=1 // loop_header_branch
      %20 = sbr.rel (%p18) target = $region8
    $region5: #{tpu_custom_call.1} parent=1 // loop_body
      %s22 = ssub.s32 %s17, 1
      %s23 = ssub.s32 %s17, 2
      %s24 = sadd.s32 %s17, 1
      %s25 = ssub.s32 %s17, %s24
      %p26 = scmp.eq.s32.totalorder %s25, 0
      %s28 = sadd.s32 %s27, 1
      %s29 = scalar_select %p26, %s27, %s28
      %p32 = pneg %p26
      %p33 = scmp.eq.s32.totalorder %s17, 3
      %p34 = por %p32, %p33
      %p35 = scmp.ne.s32.totalorder %s27, %s30
      %p36 = scmp.eq.s32.totalorder %s17, 0
      %p37 = por %p35, %p36
      %p38 = scmp.ne.s32.totalorder %s27, %s30
      %p39 = scmp.eq.s32.totalorder %s22, 3
      %p40 = por %p38, %p39
      %p41 = scmp.ne.s32.totalorder %s30, %s31
      %p42 = scmp.eq.s32.totalorder %s22, 0
      %p43 = por %p41, %p42
      %p44 = scmp.ne.s32.totalorder %s30, %s31
      %p45 = scmp.eq.s32.totalorder %s23, 3
      %p46 = por %p44, %p45
      %p48 = scmp.ne.s32.totalorder %s31, %s47
      %p49 = scmp.eq.s32.totalorder %s23, 0
      %p50 = por %p48, %p49
      %s51 = ssub.s32 %s17, %s24
      %p52 = scmp.eq.s32.totalorder %s51, 0
      %s54 = sadd.s32 %s53, 1
      %s55 = scalar_select %p52, %s53, %s54
      %p58 = pneg %p52
      %p59 = scmp.eq.s32.totalorder %s17, 3
      %p60 = por %p58, %p59
      %p61 = scmp.ne.s32.totalorder %s53, %s56
      %p62 = scmp.eq.s32.totalorder %s17, 0
      %p63 = por %p61, %p62
      %p64 = scmp.ne.s32.totalorder %s53, %s56
      %p65 = scmp.eq.s32.totalorder %s22, 3
      %p66 = por %p64, %p65
      %p67 = scmp.ne.s32.totalorder %s56, %s57
      %p68 = scmp.eq.s32.totalorder %s22, 0
      %p69 = por %p67, %p68
      %p70 = scmp.ne.s32.totalorder %s56, %s57
      %p71 = scmp.eq.s32.totalorder %s23, 3
      %p72 = por %p70, %p71
      %p74 = scmp.ne.s32.totalorder %s57, %s73
      %p75 = scmp.eq.s32.totalorder %s23, 0
      %p76 = por %p74, %p75
      %s77 = ssub.s32 %s17, %s24
      %p78 = scmp.eq.s32.totalorder %s77, 0
      %s80 = sadd.s32 %s79, 1
      %s81 = scalar_select %p78, %s79, %s80
      %p84 = pneg %p78
      %p85 = scmp.eq.s32.totalorder %s17, 3
      %p86 = por %p84, %p85
      %p87 = scmp.ne.s32.totalorder %s79, %s82
      %p88 = scmp.eq.s32.totalorder %s17, 0
      %p89 = por %p87, %p88
      %p90 = scmp.ne.s32.totalorder %s79, %s82
      %p91 = scmp.eq.s32.totalorder %s22, 3
      %p92 = por %p90, %p91
      %p93 = scmp.ne.s32.totalorder %s82, %s83
      %p94 = scmp.eq.s32.totalorder %s22, 0
      %p95 = por %p93, %p94
      %p96 = scmp.ne.s32.totalorder %s82, %s83
      %p97 = scmp.eq.s32.totalorder %s23, 3
      %p98 = por %p96, %p97
      %p100 = scmp.ne.s32.totalorder %s83, %s99
      %p101 = scmp.eq.s32.totalorder %s23, 0
      %p102 = por %p100, %p101
      %p103 = scmp.le.s32.totalorder 1, %s17
      %p104 = scmp.lt.s32.totalorder %s17, 5
      %p105 = pnand %p103, %p104
      %p106 = pneg %p105
      // Predicated region
      $region9: #{tpu_custom_call.1} parent=5 // pred_check
        _
      $region10: #{tpu_custom_call.1} parent=5 // pred_check_branch
        %108 = sbr.rel (%p105) target = $region12
      $region11: #{tpu_custom_call.1} parent=5 // pred_region
        %s109 = ssub.s32 %s17, 1
      $region12: #{tpu_custom_call.1} parent=5 // pred_fallthru
        _
      %p110 = scmp.lt.s32.totalorder %s17, 4
      // Predicated region
      $region13: #{tpu_custom_call.1} parent=5 // pred_check
        %p111 = pneg %p110
      $region14: #{tpu_custom_call.1} parent=5 // pred_check_branch
        %113 = sbr.rel (%p111) target = $region16
      $region15: #{tpu_custom_call.1} parent=5 // pred_region
        // Predicated region
        $region17: #{tpu_custom_call.1} parent=15 // pred_check
          %p114 = pneg %p37
        $region18: #{tpu_custom_call.1} parent=15 // pred_check_branch
          %116 = sbr.rel (%p114) target = $region20
        $region19: #{tpu_custom_call.1} parent=15 // pred_region
          %s117 = sand.u32 %s27, 1
          %s118 = scalar_lea.sflag [#allocation3], %s117
          %s119 = sand.u32 %s27, 1
          %s120 = smul.addr %s119, 16
          %s121 = scalar_lea.vmem [#allocation2], %s120
          %s122 = smul.u32 2, %s17
          %s123 = ssub.s32 7, %s122
          %p124 = scmp.lt.s32.totalorder %s123, 2
          %s125 = scalar_select %p124, %s123, 2
          %s126 = smul.u32 128, %s125
          %s128 = ssub.s32 256, %s126
          %129 = vsyncadd %s118, %s128
          %p130 = scmp.ne.s32.totalorder 0, %s126
          %s131 = smul.addr %s122, 128
          %s132 = scalar_lea.hbm %s0, %s131
          %s133 = smul.u32 8, %s125
          %s134 = sshll.u32 %s121, 4
          %s135 = int_to_ptr.vmem [resolvable:$true] %s134
          %s136 = sshll.u32 %s133, 4
          %140 = dma.hbm_to_vmem [thread:$0]  (%p130), %s132, %s136, %s135, %s118, 128, 128, 8
        $region20: #{tpu_custom_call.1} parent=15 // pred_fallthru
          _
        // Predicated region
        $region21: #{tpu_custom_call.1} parent=15 // pred_check
          %p141 = pneg %p63
        $region22: #{tpu_custom_call.1} parent=15 // pred_check_branch
          %143 = sbr.rel (%p141) target = $region24
        $region23: #{tpu_custom_call.1} parent=15 // pred_region
          %s144 = sand.u32 %s53, 1
          %s145 = scalar_lea.sflag [#allocation6], %s144
          %s146 = sand.u32 %s53, 1
          %s147 = smul.addr %s146, 16
          %s148 = scalar_lea.vmem [#allocation5], %s147
          %s149 = smul.u32 2, %s17
          %s150 = ssub.s32 7, %s149
          %p151 = scmp.lt.s32.totalorder %s150, 2
          %s152 = scalar_select %p151, %s150, 2
          %s153 = smul.u32 128, %s152
          %s155 = ssub.s32 256, %s153
          %156 = vsyncadd %s145, %s155
          %p157 = scmp.ne.s32.totalorder 0, %s153
          %s158 = smul.addr %s149, 128
          %s159 = scalar_lea.hbm %s1, %s158
          %s160 = smul.u32 8, %s152
          %s161 = sshll.u32 %s148, 4
          %s162 = int_to_ptr.vmem [resolvable:$true] %s161
          %s163 = sshll.u32 %s160, 4
          %167 = dma.hbm_to_vmem [thread:$0]  (%p157), %s159, %s163, %s162, %s145, 128, 128, 8
        $region24: #{tpu_custom_call.1} parent=15 // pred_fallthru
          _
      $region16: #{tpu_custom_call.1} parent=5 // pred_fallthru
        _
      %p168 = scmp.le.s32.totalorder 1, %s17
      %p169 = scmp.lt.s32.totalorder %s17, 5
      %p170 = pnand %p168, %p169
      %p171 = pneg %p170
      // Predicated region
      $region25: #{tpu_custom_call.1} parent=5 // pred_check
        _
      $region26: #{tpu_custom_call.1} parent=5 // pred_check_branch
        %173 = sbr.rel (%p170) target = $region28
      $region27: #{tpu_custom_call.1} parent=5 // pred_region
        %s174 = ssub.s32 %s17, 1
        %s175 = sand.u32 %s30, 1
        %s176 = scalar_lea.sflag [#allocation3], %s175
        %s177 = sand.u32 %s30, 1
        %s178 = smul.addr %s177, 16
        %s179 = scalar_lea.vmem [#allocation2], %s178
        // Predicated region
        $region29: #{tpu_custom_call.1} parent=27 // pred_check
          %p180 = pneg %p43
        $region30: #{tpu_custom_call.1} parent=27 // pred_check_branch
          %182 = sbr.rel (%p180) target = $region32
        $region31: #{tpu_custom_call.1} parent=27 // pred_region
          %183 = dma.done %s176, 256
        $region32: #{tpu_custom_call.1} parent=27 // pred_fallthru
          _
        %s184 = sand.u32 %s56, 1
        %s185 = scalar_lea.sflag [#allocation6], %s184
        %s186 = sand.u32 %s56, 1
        %s187 = smul.addr %s186, 16
        %s188 = scalar_lea.vmem [#allocation5], %s187
        // Predicated region
        $region33: #{tpu_custom_call.1} parent=27 // pred_check
          %p189 = pneg %p69
        $region34: #{tpu_custom_call.1} parent=27 // pred_check_branch
          %191 = sbr.rel (%p189) target = $region36
        $region35: #{tpu_custom_call.1} parent=27 // pred_region
          %192 = dma.done %s185, 256
        $region36: #{tpu_custom_call.1} parent=27 // pred_fallthru
          _
        %s193 = sand.u32 %s30, 1
        %s194 = scalar_lea.sflag [#allocation3], %s193
        %s195 = sand.u32 %s30, 1
        %s196 = smul.addr %s195, 16
        %s197 = scalar_lea.vmem [#allocation2], %s196
        %p198 = pneg %p43
        %p199 = pneg %p40
        %s200 = sand.u32 %s56, 1
        %s201 = scalar_lea.sflag [#allocation6], %s200
        %s202 = sand.u32 %s56, 1
        %s203 = smul.addr %s202, 16
        %s204 = scalar_lea.vmem [#allocation5], %s203
        %p205 = pneg %p69
        %p206 = pneg %p66
        %p207 = pneg %p95
        %p208 = pneg %p92
        %s209 = sand.u32 %s82, 1
        %s210 = scalar_lea.sflag [#allocation4], %s209
        %s211 = sand.u32 %s82, 1
        %s212 = smul.addr %s211, 8
        %s213 = scalar_lea.vmem [#allocation7], %s212
        %s214 = smul.u32 2, %s22
        %s215 = ssub.s32 7, %s214
        %p216 = scmp.lt.s32.totalorder %s215, 2
        %s217 = scalar_select %p216, %s215, 2
        %s218 = smul.u32 128, %s217
        %s219 = smul.u32 2, %s22
        %s220 = ssub.s32 7, %s219
        %p221 = scmp.lt.s32.totalorder %s220, 2
        %s222 = scalar_select %p221, %s220, 2
        %s223 = smul.u32 128, %s222
        %v224 = vld [vmem:[%s188] sm:$0xff]
        %v225 = vld [vmem:[%s188 + $0x8] sm:$0xff]
        %v226 = vld [vmem:[%s179] sm:$0xff]
        %v227 = vld [vmem:[%s179 + $0x8] sm:$0xff]
        %v228 = vsub.f32 %v224, %v226
        %v229 = vsub.f32 %v225, %v227
        %v230 = vand.u32 2147483647, %v228
        %v231 = vand.u32 2147483647, %v229
        %p232 = scmp.eq.s32.totalorder %s22, 3
        %p233 = scmp.ne.s32.totalorder %s22, 3
        // Predicated region
        $region37: #{tpu_custom_call.1} parent=27 // pred_check
          %p234 = pneg %p233
        $region38: #{tpu_custom_call.1} parent=27 // pred_check_branch
          %236 = sbr.rel (%p234) target = $region40
        $region39: #{tpu_custom_call.1} parent=27 // pred_region
          %v237 = vadd.f32 %v230, %v231
          %238 = vst [vmem:[%s213] sm:$0xff] %v237
        $region40: #{tpu_custom_call.1} parent=27 // pred_fallthru
          _
        // Predicated region
        $region41: #{tpu_custom_call.1} parent=27 // pred_check
          %p239 = pneg %p232
        $region42: #{tpu_custom_call.1} parent=27 // pred_check_branch
          %241 = sbr.rel (%p239) target = $region44
        $region43: #{tpu_custom_call.1} parent=27 // pred_region
          %s242 = smul.u32 %s22, 2048
          %s243 = ssub.s32 6656, %s242
          %v244 = vlaneseq
          %v245 = vshrl.u32 %v244, 7
          %v246 = vadd.s32 %v245, 8
          %v247 = vlaneseq
          %v248 = vand.u32 %v247, 127
          %v249 = vmul.u32 %v245, 128
          %v250 = vmul.u32 %v246, 128
          %v251 = vadd.s32 %v249, %v248
          %v252 = vadd.s32 %v250, %v248
          %v253 = vstv %s243
          %vm254 = vcmp.lt.s32.totalorder %v251, %v253
          %vm255 = vcmp.lt.s32.totalorder %v252, %v253
          %v256 = vsel %vm254, %v230, 0.0
          %v257 = vsel %vm255, %v231, 0.0
          %v258 = vadd.f32 %v256, %v257
          %259 = vst [vmem:[%s213] sm:$0xff] %v258
        $region44: #{tpu_custom_call.1} parent=27 // pred_fallthru
          _
        %s260 = sand.u32 %s82, 1
        %s261 = scalar_lea.sflag [#allocation4], %s260
        %s262 = sand.u32 %s82, 1
        %s263 = smul.addr %s262, 8
        %s264 = scalar_lea.vmem [#allocation7], %s263
        // Predicated region
        $region45: #{tpu_custom_call.1} parent=27 // pred_check
          %p265 = pneg %p92
        $region46: #{tpu_custom_call.1} parent=27 // pred_check_branch
          %267 = sbr.rel (%p265) target = $region48
        $region47: #{tpu_custom_call.1} parent=27 // pred_region
          %s269 = ssub.s32 128, 128
          %270 = vsyncadd %s261, %s269
          %s271 = smul.addr %s22, 128
          %s272 = scalar_lea.hbm %s2, %s271
          %s274 = sshll.u32 %s264, 4
          %s275 = int_to_ptr.vmem [resolvable:$true] %s274
          %277 = dma.vmem_to_hbm [thread:$0]  %s275, 128, %s272, %s261
        $region48: #{tpu_custom_call.1} parent=27 // pred_fallthru
          _
      $region28: #{tpu_custom_call.1} parent=5 // pred_fallthru
        _
      %p278 = scmp.le.s32.totalorder 2, %s17
      // Predicated region
      $region49: #{tpu_custom_call.1} parent=5 // pred_check
        %p279 = pneg %p278
      $region50: #{tpu_custom_call.1} parent=5 // pred_check_branch
        %281 = sbr.rel (%p279) target = $region52
      $region51: #{tpu_custom_call.1} parent=5 // pred_region
        %s282 = ssub.s32 %s17, 2
        // Predicated region
        $region53: #{tpu_custom_call.1} parent=51 // pred_check
          %p283 = pneg %p98
        $region54: #{tpu_custom_call.1} parent=51 // pred_check_branch
          %285 = sbr.rel (%p283) target = $region56
        $region55: #{tpu_custom_call.1} parent=51 // pred_region
          %s286 = sand.u32 %s83, 1
          %s287 = scalar_lea.sflag [#allocation4], %s286
          %s288 = sand.u32 %s83, 1
          %s289 = smul.addr %s288, 8
          %s290 = scalar_lea.vmem [#allocation7], %s289
          %291 = dma.done %s287, 128
        $region56: #{tpu_custom_call.1} parent=51 // pred_fallthru
          _
      $region52: #{tpu_custom_call.1} parent=5 // pred_fallthru
        _
    $region6: #{tpu_custom_call.1} parent=1 // loop_footer
      %s21 = sadd.s32 1, %s17
    $region7: #{tpu_custom_call.1} parent=1 // loop_footer_branch
      %16 = sbr.rel target = $region3
    $region8: #{tpu_custom_call.1} parent=1 // loop_exit
      _
    %292 = vsyncpa [#allocation3], 1
    %s293 = scalar_lea.sflag [#allocation3], 1
    %294 = vsyncpa %s293, 1
    %295 = vsyncpa [#allocation6], 1
    %s296 = scalar_lea.sflag [#allocation6], 1
    %297 = vsyncpa %s296, 1
    %298 = vsyncpa [#allocation4], 1
    %s299 = scalar_lea.sflag [#allocation4], 1
    %300 = vsyncpa %s299, 1

</llo_original>
